<compile_context>
chip_gen: v5e
topology: v5e:2x2
jax: 0.10.0
libtpu: 0.0.40
codegen_flags: <defaults>
</compile_context>

<pallas_src>
import jax
import jax.numpy as jnp
from jax import lax
from jax.experimental import pallas as pl
from jax.experimental.pallas import tpu as pltpu


def _make_kernel(tile_rows, valid_rows, width, acc_rows, tiles_per_shard,
                 full_tiles, needs_mask):
    """Streaming per-column sum-of-squares kernel (all args are static ints)."""
    sub_groups = tile_rows // acc_rows if acc_rows > 1 else 1

    def _partial(x):
        # x: (tile_rows, width) f32 -> (acc_rows, width) per-sublane partials.
        x2 = x * x
        if acc_rows == 1:
            return jnp.sum(x2, axis=0, keepdims=True)
        # Split the sublane axis on vreg boundaries (layout no-op) and reduce
        # across vregs elementwise: pure VPU adds, no per-step cross-sublane
        # XLU reduce.  The 8->1 fold happens once, in the wrapper.
        return jnp.sum(x2.reshape(sub_groups, acc_rows, width), axis=0)

    def kernel(d_ref, out_ref):
        c = pl.program_id(0)            # shard ("parallel" axis -> megacore)
        i = pl.program_id(1)            # row tile within the shard

        @pl.when(i == 0)
        def _init():
            out_ref[...] = jnp.zeros_like(out_ref)

        x = d_ref[...].astype(jnp.float32)

        if needs_mask:
            t = c * tiles_per_shard + i          # global tile index

            @pl.when(t < full_tiles)
            def _interior():                     # interior tiles: no masking
                out_ref[...] += _partial(x)

            @pl.when(t >= full_tiles)
            def _boundary():                     # partial / padded tail tiles
                row = t * tile_rows + lax.broadcasted_iota(jnp.int32, x.shape, 0)
                out_ref[...] += _partial(jnp.where(row < valid_rows, x, 0.0))
        else:
            out_ref[...] += _partial(x)

    return kernel


def d_constraint1(d, *, target_block_bytes=6 * 1024 * 1024, force_pallas=False):
    """Pallas equivalent of D_constraint1.forward(d). Returns a scalar f32."""
    n, k = d.shape
    itemsize = jnp.dtype(d.dtype).itemsize

    # Small-input fast path: fixed pallas_call / grid / DMA setup overhead
    # dominates below a few tens of KiB on every generation.
    if not force_pallas and n * k * itemsize < 64 * 1024:
        col = jnp.sum(jnp.square(d.astype(jnp.float32)), axis=0)
        return 0.001 * jnp.sqrt(jnp.sum(jnp.square(col - 1.0)))

    # Lane-dense packing for small K dividing 128: free row-major reshape to
    # (N*K/128, 128) so VMEM tiles / vregs are not mostly lane padding.
    if k < 128 and 128 % k == 0 and (n * k) % 128 == 0:
        width, groups = 128, 128 // k
        x2d = d.reshape((n * k) // 128, 128)
    else:
        width, groups = k, 1
        x2d = d
    rows = x2d.shape[0]

    # dtype-aware sublane multiple (f32: 8, bf16: 16, int8/fp8: 32).
    row_mult = {4: 8, 2: 16, 1: 32}.get(itemsize, 8)

    # Tile sizing from the lane-PADDED width (the actual VMEM footprint).
    padded_width = pl.cdiv(width, 128) * 128
    tile_rows = (target_block_bytes // (padded_width * itemsize)) // row_mult * row_mult
    tile_rows = max(row_mult, tile_rows)
    if tile_rows >= rows:
        tile_rows = rows                     # single full-extent block is allowed
    tiles_total = pl.cdiv(rows, tile_rows)
    full_tiles = rows // tile_rows           # tiles fully inside the array

    # Split the row reduction across 2 shards ("parallel" axis): on v7x the
    # two TensorCores each stream half the rows; on v5e/v6e it serializes.
    num_shards = 2 if tiles_total >= 2 else 1
    tiles_per_shard = pl.cdiv(tiles_total, num_shards)
    padded_grid = num_shards * tiles_per_shard > tiles_total
    needs_mask = num_shards * tiles_per_shard > full_tiles

    # Per-sublane accumulator rows (folded to 1 only in the wrapper finalize).
    acc_rows = 8 if tile_rows % 8 == 0 else 1

    if padded_grid:
        # Clamp the DMA source of padded (fully out-of-range) tiles onto the
        # last real tile; the kernel masks all of their rows to zero.
        def in_index_map(c, i):
            return (jnp.minimum(c * tiles_per_shard + i, tiles_total - 1), 0)
    else:
        def in_index_map(c, i):
            return (c * tiles_per_shard + i, 0)

    kernel = _make_kernel(tile_rows, rows, width, acc_rows, tiles_per_shard,
                          full_tiles, needs_mask)

    # Raise the scoped VMEM limit only if the requested tiles need it; keep
    # headroom under v7x's 64 MiB physical VMEM.
    tile_bytes = tile_rows * padded_width * itemsize
    vmem_needed = 2 * tile_bytes + 2 * acc_rows * padded_width * 4 + (1 << 20)
    vmem_limit = (int(min(vmem_needed, 48 * 1024 * 1024))
                  if vmem_needed > (14 << 20) else None)

    partials = pl.pallas_call(
        kernel,
        out_shape=jax.ShapeDtypeStruct((num_shards, acc_rows, width), jnp.float32),
        grid=(num_shards, tiles_per_shard),
        in_specs=[pl.BlockSpec((tile_rows, width), in_index_map)],
        out_specs=pl.BlockSpec((None, acc_rows, width), lambda c, i: (c, 0, 0)),
        compiler_params=pltpu.CompilerParams(
            dimension_semantics=("parallel", "arbitrary"),
            vmem_limit_bytes=vmem_limit),
        cost_estimate=pl.CostEstimate(
            flops=2 * n * k,
            transcendentals=0,
            bytes_accessed=n * k * itemsize + num_shards * acc_rows * width * 4),
    )(x2d)

    # Tiny finalize in plain JAX: fold shards + sublanes (+ lane groups for the
    # lane-dense packing: lane j holds original column j % k), then the
    # (-1, square, sum, sqrt, *0.001) scalar math.
    col = jnp.sum(partials, axis=(0, 1))                 # (width,)
    if groups > 1:
        col = jnp.sum(col.reshape(groups, k), axis=0)    # (k,)
    return 0.001 * jnp.sqrt(jnp.sum(jnp.square(col - 1.0)))


def _reference(d):
    """Pure-JAX mirror of the PyTorch math (high-precision matmul)."""
    k = d.shape[1]
    eye = jnp.eye(k, dtype=jnp.float32)
    gram = jnp.matmul(d.T.astype(jnp.float32), d.astype(jnp.float32),
                      precision=jax.lax.Precision.HIGHEST)
    return 0.001 * jnp.linalg.norm(gram * eye - eye)


if __name__ == "__main__":
    k1, k2, k3 = jax.random.split(jax.random.PRNGKey(0), 3)

    # A) Lane-dense path (K=32 divides 128), multi-tile grid, 2-way "parallel"
    #    shard split (small target_block_bytes forces several tiles).
    dA = jax.random.normal(k1, (512, 32), dtype=jnp.float32)
    lossA = d_constraint1(dA, target_block_bytes=32 * 128 * 4, force_pallas=True)
    jax.block_until_ready(lossA)
    refA = _reference(dA)
    assert jnp.allclose(lossA, refA, rtol=1e-4, atol=1e-6), (lossA, refA)

    # B) Generic width (K=48 does not divide 128): padded grid, clamped DMA
    #    for the padded tile, boundary-row masking gated to the tail tiles.
    dB = jax.random.normal(k2, (100, 48), dtype=jnp.float32)
    lossB = d_constraint1(dB, target_block_bytes=16 * 128 * 4, force_pallas=True)
    jax.block_until_ready(lossB)
    refB = _reference(dB)
    assert jnp.allclose(lossB, refB, rtol=1e-4, atol=1e-6), (lossB, refB)

    # C) Tiny input -> automatic plain-JAX fast path (no pallas_call overhead).
    dC = jax.random.normal(k3, (64, 32), dtype=jnp.float32)
    lossC = d_constraint1(dC)
    jax.block_until_ready(lossC)
    refC = _reference(dC)
    assert jnp.allclose(lossC, refC, rtol=1e-4, atol=1e-6), (lossC, refC)

    print("KERNEL_OK")
</pallas_src>

<mosaic_0001>
module attributes {stable_mosaic.version = 11 : i64} {
  func.func @kernel(%arg0: i32, %arg1: i32, %arg2: memref<32x128xf32, #tpu.memory_space<vmem>>, %arg3: memref<1x8x128xf32, #tpu.memory_space<vmem>>) attributes {dimension_semantics = [#tpu.dimension_semantics<parallel>, #tpu.dimension_semantics<arbitrary>], iteration_bounds = array<i64: 2, 2>, scalar_prefetch = 0 : i64, scratch_operands = 0 : i64, tpu.core_type = #tpu.core_type<tc>, window_params = [{transform_indices = @transform_0, window_bounds = array<i64: 32, 128>}, {transform_indices = @transform_1, window_bounds = array<i64: 1, 8, 128>}]} {
    %c0_i32 = arith.constant 0 : i32
    %0 = arith.cmpi eq, %arg1, %c0_i32 : i32
    %1 = arith.extui %0 : i1 to i32
    %c0_i32_0 = arith.constant 0 : i32
    %2 = arith.cmpi ne, %1, %c0_i32_0 : i32
    scf.if %2 {
      %cst_8 = arith.constant 0.000000e+00 : f32
      %13 = vector.broadcast %cst_8 : f32 to vector<8x128xf32>
      %c0_9 = arith.constant 0 : index
      %c0_10 = arith.constant 0 : index
      %c0_11 = arith.constant 0 : index
      %14 = vector.load %arg3[%c0_9, %c0_10, %c0_11] : memref<1x8x128xf32, #tpu.memory_space<vmem>>, vector<1x8x128xf32>
      %15 = vector.shape_cast %14 : vector<1x8x128xf32> to vector<8x128xf32>
      %16 = vector.shape_cast %13 : vector<8x128xf32> to vector<1x8x128xf32>
      tpu.vector_store %arg3[%c0_9, %c0_10, %c0_11], %16 {strides = array<i32>} : memref<1x8x128xf32, #tpu.memory_space<vmem>>, vector<1x8x128xf32>,
    } else {
    }
    %c0 = arith.constant 0 : index
    %c0_1 = arith.constant 0 : index
    %3 = vector.load %arg2[%c0, %c0_1] : memref<32x128xf32, #tpu.memory_space<vmem>>, vector<32x128xf32>
    %c0_2 = arith.constant 0 : index
    %c0_3 = arith.constant 0 : index
    %c0_4 = arith.constant 0 : index
    %4 = vector.load %arg3[%c0_2, %c0_3, %c0_4] : memref<1x8x128xf32, #tpu.memory_space<vmem>>, vector<1x8x128xf32>
    %5 = vector.shape_cast %4 : vector<1x8x128xf32> to vector<8x128xf32>
    %6 = arith.mulf %3, %3 : vector<32x128xf32>
    %7 = vector.shape_cast %6 : vector<32x128xf32> to vector<4x8x128xf32>
    %cst = arith.constant dense<0.000000e+00> : vector<8x128xf32>
    %8 = vector.multi_reduction <add>, %7, %cst [0] : vector<4x8x128xf32> to vector<8x128xf32>
    %9 = arith.addf %5, %8 : vector<8x128xf32>
    %c0_5 = arith.constant 0 : index
    %c0_6 = arith.constant 0 : index
    %c0_7 = arith.constant 0 : index
    %10 = vector.load %arg3[%c0_5, %c0_6, %c0_7] : memref<1x8x128xf32, #tpu.memory_space<vmem>>, vector<1x8x128xf32>
    %11 = vector.shape_cast %10 : vector<1x8x128xf32> to vector<8x128xf32>
    %12 = vector.shape_cast %9 : vector<8x128xf32> to vector<1x8x128xf32>
    tpu.vector_store %arg3[%c0_5, %c0_6, %c0_7], %12 {strides = array<i32>} : memref<1x8x128xf32, #tpu.memory_space<vmem>>, vector<1x8x128xf32>,
    return
  }
  func.func @transform_0(%arg0: i32, %arg1: i32) -> (i32, i32) {
    %c2_i32 = arith.constant 2 : i32
    %0 = arith.muli %arg0, %c2_i32 : i32
    %1 = arith.addi %0, %arg1 : i32
    %c0_i32 = arith.constant 0 : i32
    %c0_i32_0 = arith.constant 0 : i32
    return %1, %c0_i32 : i32, i32
  }
  func.func @transform_1(%arg0: i32, %arg1: i32) -> (i32, i32, i32) {
    %c0_i32 = arith.constant 0 : i32
    %c0_i32_0 = arith.constant 0 : i32
    %c0_i32_1 = arith.constant 0 : i32
    return %arg0, %c0_i32, %c0_i32_0 : i32, i32, i32
  }
}

</mosaic_0001>

<llo_original>
// kernel: tpu_custom_call.1
$region0: #{tpu_custom_call.1}
  #allocation0 [shape = 'u32[]', space=smem, size = 0x4, offset = 0x4, fixed_abs, tag = 'smem constant byte address 0x4 - core index']
  #allocation1 [shape = 'u32[72,128]{1,0:T(1,128)}', space=vmem, size = 0x9000, scoped, tag = 'internal scratch']
  %s0 = inlined_call_operand.hbm [shape: f32[128,128], index: 0, kind: input, shape index: {}]
  %s1 = inlined_call_operand.hbm [shape: f32[2,8,128], index: 1, kind: output, shape index: {}]
  %s2 = sld [smem:[#allocation0]]
  $region45: #{tpu_custom_call.1} parent=0
    _
  %s4 = ssub.s32 1, %s2
  %s5 = scalar_select 0, %s4, %s2
  $region1: #{tpu_custom_call.1} parent=0
    #allocation2 [shape = 'u8[32768]{0}', space=vmem, size = 0x8000, scoped, tag = 'input window, operand 0']
    #allocation3 [shape = 's32[2]{0}', space=sflag, size = 0x8, scoped, tag = 'scoped memory for tpu_custom_call.1']
    #allocation4 [shape = 's32[2]{0}', space=sflag, size = 0x8, scoped, tag = 'scoped memory for tpu_custom_call.1']
    #allocation5 [shape = 'u8[8192]{0}', space=vmem, size = 0x2000, scoped, tag = 'output window, operand 0']
    %6 = vsyncpa [#allocation3], 0
    %s7 = scalar_lea.sflag [#allocation3], 1
    %8 = vsyncpa %s7, 0
    %9 = vsyncpa [#allocation4], 0
    %s10 = scalar_lea.sflag [#allocation4], 1
    %11 = vsyncpa %s10, 0
    loop: start=0, step=1, limit=6
    $region2: #{tpu_custom_call.1} parent=1 // loop_pre_header
      _
    $region3: #{tpu_custom_call.1} parent=1 // loop_header
      %s13 = sphi 0, %s17
      %p14 = scmp.ge.s32.totalorder %s13, 6
      %s20 = sphi 0, %s32
      %s21 = sphi 0, %s28
      %s22 = sphi 0, %s20
      %s23 = sphi 0, %s21
      %s24 = sphi 0, %s22
      %s25 = sphi 0, %s23
      %s39 = sphi 0, %s41
      %s42 = sphi 0, %s39
      %s43 = sphi 0, %s42
      %s59 = sphi 0, %s43
      %s65 = sphi 0, %s67
      %s68 = sphi 0, %s65
      %s69 = sphi 0, %s68
      %s85 = sphi 0, %s69
    $region4: #{tpu_custom_call.1} parent=1 // loop_header_branch
      %16 = sbr.rel (%p14) target = $region8
    $region5: #{tpu_custom_call.1} parent=1 // loop_body
      %s18 = ssub.s32 %s13, 1
      %s19 = ssub.s32 %s13, 2
      %s26 = sadd.s32 1, %s21
      %p27 = scmp.ge.s32.totalorder %s26, 2
      %s28 = scalar_select %p27, 0, %s26
      %s29 = sadd.s32 1, %s20
      %s30 = scalar_select %p27, %s29, %s20
      %p31 = scmp.ge.s32.totalorder %s30, 2
      %s32 = scalar_select %p31, 0, %s30
      %s33 = smul.u32 %s20, 2
      %s34 = sadd.s32 %s33, %s21
      %s35 = smul.u32 %s32, 2
      %s36 = sadd.s32 %s35, %s28
      %s37 = ssub.s32 %s34, %s36
      %p38 = scmp.eq.s32.totalorder %s37, 0
      %s40 = sadd.s32 %s39, 1
      %s41 = scalar_select %p38, %s39, %s40
      %p44 = pneg %p38
      %p45 = scmp.eq.s32.totalorder %s13, 3
      %p46 = por %p44, %p45
      %p47 = scmp.ne.s32.totalorder %s39, %s42
      %p48 = scmp.eq.s32.totalorder %s13, 0
      %p49 = por %p47, %p48
      %p50 = scmp.ne.s32.totalorder %s39, %s42
      %p51 = scmp.eq.s32.totalorder %s18, 3
      %p52 = por %p50, %p51
      %p53 = scmp.ne.s32.totalorder %s42, %s43
      %p54 = scmp.eq.s32.totalorder %s18, 0
      %p55 = por %p53, %p54
      %p56 = scmp.ne.s32.totalorder %s42, %s43
      %p57 = scmp.eq.s32.totalorder %s19, 3
      %p58 = por %p56, %p57
      %p60 = scmp.ne.s32.totalorder %s43, %s59
      %p61 = scmp.eq.s32.totalorder %s19, 0
      %p62 = por %p60, %p61
      %s63 = ssub.s32 %s20, %s32
      %p64 = scmp.eq.s32.totalorder %s63, 0
      %s66 = sadd.s32 %s65, 1
      %s67 = scalar_select %p64, %s65, %s66
      %p70 = pneg %p64
      %p71 = scmp.eq.s32.totalorder %s13, 3
      %p72 = por %p70, %p71
      %p73 = scmp.ne.s32.totalorder %s65, %s68
      %p74 = scmp.eq.s32.totalorder %s13, 0
      %p75 = por %p73, %p74
      %p76 = scmp.ne.s32.totalorder %s65, %s68
      %p77 = scmp.eq.s32.totalorder %s18, 3
      %p78 = por %p76, %p77
      %p79 = scmp.ne.s32.totalorder %s68, %s69
      %p80 = scmp.eq.s32.totalorder %s18, 0
      %p81 = por %p79, %p80
      %p82 = scmp.ne.s32.totalorder %s68, %s69
      %p83 = scmp.eq.s32.totalorder %s19, 3
      %p84 = por %p82, %p83
      %p86 = scmp.ne.s32.totalorder %s69, %s85
      %p87 = scmp.eq.s32.totalorder %s19, 0
      %p88 = por %p86, %p87
      %p89 = scmp.le.s32.totalorder 1, %s13
      %p90 = scmp.lt.s32.totalorder %s13, 5
      %p91 = pnand %p89, %p90
      %p92 = pneg %p91
      // Predicated region
      $region9: #{tpu_custom_call.1} parent=5 // pred_check
        _
      $region10: #{tpu_custom_call.1} parent=5 // pred_check_branch
        %94 = sbr.rel (%p91) target = $region12
      $region11: #{tpu_custom_call.1} parent=5 // pred_region
        %s95 = ssub.s32 %s13, 1
      $region12: #{tpu_custom_call.1} parent=5 // pred_fallthru
        _
      %p96 = scmp.lt.s32.totalorder %s13, 4
      // Predicated region
      $region13: #{tpu_custom_call.1} parent=5 // pred_check
        %p97 = pneg %p96
      $region14: #{tpu_custom_call.1} parent=5 // pred_check_branch
        %99 = sbr.rel (%p97) target = $region16
      $region15: #{tpu_custom_call.1} parent=5 // pred_region
        // Predicated region
        $region17: #{tpu_custom_call.1} parent=15 // pred_check
          %p100 = pneg %p49
        $region18: #{tpu_custom_call.1} parent=15 // pred_check_branch
          %102 = sbr.rel (%p100) target = $region20
        $region19: #{tpu_custom_call.1} parent=15 // pred_region
          %s103 = sand.u32 %s39, 1
          %s104 = scalar_lea.sflag [#allocation3], %s103
          %s105 = sand.u32 %s39, 1
          %s106 = smul.addr %s105, 32
          %s107 = scalar_lea.vmem [#allocation2], %s106
          %s108 = smul.u32 %s20, 2
          %s109 = sadd.s32 %s108, %s21
          %s110 = smul.u32 4, %s109
          %112 = vsyncadd %s104, 0
          %s113 = smul.addr %s110, 8
          %s114 = scalar_lea.hbm %s0, %s113
          %s115 = sshll.u32 %s114, 4
          %s116 = int_to_ptr.hbm [resolvable:$true] %s115
          %s117 = sshll.u32 %s107, 4
          %s118 = int_to_ptr.vmem [resolvable:$true] %s117
          %123 = dma.hbm_to_vmem [thread:$0]  %s116, 512, %s118, %s104, 128, 128, 8
        $region20: #{tpu_custom_call.1} parent=15 // pred_fallthru
          _
      $region16: #{tpu_custom_call.1} parent=5 // pred_fallthru
        _
      %p124 = scmp.le.s32.totalorder 1, %s13
      %p125 = scmp.lt.s32.totalorder %s13, 5
      %p126 = pnand %p124, %p125
      %p127 = pneg %p126
      // Predicated region
      $region21: #{tpu_custom_call.1} parent=5 // pred_check
        _
      $region22: #{tpu_custom_call.1} parent=5 // pred_check_branch
        %129 = sbr.rel (%p126) target = $region24
      $region23: #{tpu_custom_call.1} parent=5 // pred_region
        %s130 = ssub.s32 %s13, 1
        %s131 = sand.u32 %s42, 1
        %s132 = scalar_lea.sflag [#allocation3], %s131
        %s133 = sand.u32 %s42, 1
        %s134 = smul.addr %s133, 32
        %s135 = scalar_lea.vmem [#allocation2], %s134
        // Predicated region
        $region25: #{tpu_custom_call.1} parent=23 // pred_check
          %p136 = pneg %p55
        $region26: #{tpu_custom_call.1} parent=23 // pred_check_branch
          %138 = sbr.rel (%p136) target = $region28
        $region27: #{tpu_custom_call.1} parent=23 // pred_region
          %140 = dma.done %s132, 512
        $region28: #{tpu_custom_call.1} parent=23 // pred_fallthru
          _
        %s141 = sand.u32 %s42, 1
        %s142 = scalar_lea.sflag [#allocation3], %s141
        %s143 = sand.u32 %s42, 1
        %s144 = smul.addr %s143, 32
        %s145 = scalar_lea.vmem [#allocation2], %s144
        %p146 = pneg %p55
        %p147 = pneg %p52
        %p148 = pneg %p81
        %p149 = pneg %p78
        %s150 = sand.u32 %s68, 1
        %s151 = scalar_lea.sflag [#allocation4], %s150
        %s152 = sand.u32 %s68, 1
        %s153 = smul.addr %s152, 8
        %s154 = scalar_lea.vmem [#allocation5], %s153
        %s155 = smul.u32 %s22, 2
        %s156 = sadd.s32 %s155, %s23
        %s157 = smul.u32 4, %s156
        %p158 = scmp.eq.s32.totalorder %s23, 0
        // Predicated region
        $region29: #{tpu_custom_call.1} parent=23 // pred_check
          %p159 = pneg %p158
        $region30: #{tpu_custom_call.1} parent=23 // pred_check_branch
          %161 = sbr.rel (%p159) target = $region32
        $region31: #{tpu_custom_call.1} parent=23 // pred_region
          %162 = vst [vmem:[%s154] sm:$0xff] 0.0
        $region32: #{tpu_custom_call.1} parent=23 // pred_fallthru
          _
        %v163 = vld [vmem:[%s135] sm:$0xff]
        %v164 = vld [vmem:[%s135 + $0x8] sm:$0xff]
        %v165 = vld [vmem:[%s135 + $0x10] sm:$0xff]
        %v166 = vld [vmem:[%s135 + $0x18] sm:$0xff]
        %v167 = vld [vmem:[%s154] sm:$0xff]
        %v168 = vmul.f32 %v163, %v163
        %v169 = vmul.f32 %v164, %v164
        %v170 = vmul.f32 %v165, %v165
        %v171 = vmul.f32 %v166, %v166
        %v172 = vadd.f32 %v168, %v169
        %v173 = vadd.f32 %v172, %v170
        %v174 = vadd.f32 %v173, %v171
        %v175 = vadd.f32 %v167, %v174
        %176 = vst [vmem:[%s154] sm:$0xff] %v175
        %s177 = sand.u32 %s68, 1
        %s178 = scalar_lea.sflag [#allocation4], %s177
        %s179 = sand.u32 %s68, 1
        %s180 = smul.addr %s179, 8
        %s181 = scalar_lea.vmem [#allocation5], %s180
        // Predicated region
        $region33: #{tpu_custom_call.1} parent=23 // pred_check
          %p182 = pneg %p78
        $region34: #{tpu_custom_call.1} parent=23 // pred_check_branch
          %184 = sbr.rel (%p182) target = $region36
        $region35: #{tpu_custom_call.1} parent=23 // pred_region
          %186 = vsyncadd %s178, 0
          %s187 = smul.addr %s22, 8
          %s188 = scalar_lea.hbm %s1, %s187
          %s190 = sshll.u32 %s181, 4
          %s191 = int_to_ptr.vmem [resolvable:$true] %s190
          %s192 = sshll.u32 %s188, 4
          %s193 = int_to_ptr.hbm [resolvable:$true] %s192
          %195 = dma.vmem_to_hbm [thread:$0]  %s191, 128, %s193, %s178
        $region36: #{tpu_custom_call.1} parent=23 // pred_fallthru
          _
      $region24: #{tpu_custom_call.1} parent=5 // pred_fallthru
        _
      %p196 = scmp.le.s32.totalorder 2, %s13
      // Predicated region
      $region37: #{tpu_custom_call.1} parent=5 // pred_check
        %p197 = pneg %p196
      $region38: #{tpu_custom_call.1} parent=5 // pred_check_branch
        %199 = sbr.rel (%p197) target = $region40
      $region39: #{tpu_custom_call.1} parent=5 // pred_region
        %s200 = ssub.s32 %s13, 2
        // Predicated region
        $region41: #{tpu_custom_call.1} parent=39 // pred_check
          %p201 = pneg %p84
        $region42: #{tpu_custom_call.1} parent=39 // pred_check_branch
          %203 = sbr.rel (%p201) target = $region44
        $region43: #{tpu_custom_call.1} parent=39 // pred_region
          %s204 = sand.u32 %s69, 1
          %s205 = scalar_lea.sflag [#allocation4], %s204
          %s206 = sand.u32 %s69, 1
          %s207 = smul.addr %s206, 8
          %s208 = scalar_lea.vmem [#allocation5], %s207
          %210 = dma.done %s205, 128
        $region44: #{tpu_custom_call.1} parent=39 // pred_fallthru
          _
      $region40: #{tpu_custom_call.1} parent=5 // pred_fallthru
        _
    $region6: #{tpu_custom_call.1} parent=1 // loop_footer
      %s17 = sadd.s32 1, %s13
    $region7: #{tpu_custom_call.1} parent=1 // loop_footer_branch
      %12 = sbr.rel target = $region3
    $region8: #{tpu_custom_call.1} parent=1 // loop_exit
      _
    %211 = vsyncpa [#allocation3], 1
    %s212 = scalar_lea.sflag [#allocation3], 1
    %213 = vsyncpa %s212, 1
    %214 = vsyncpa [#allocation4], 1
    %s215 = scalar_lea.sflag [#allocation4], 1
    %216 = vsyncpa %s215, 1

</llo_original>
